<compile_context>
chip_gen: v7x
topology: tpu7x:2x2x1
jax: 0.10.0
libtpu: 0.0.40
codegen_flags: <defaults>
</compile_context>

<pallas_src>
import functools

import jax
import jax.numpy as jnp
from jax import lax
from jax.experimental import pallas as pl
from jax.experimental.pallas import tpu as pltpu

_LANE = 128            # TPU vreg lane width: weight/bias padded up to this.
_NEG_PAD = -1e30       # bias value for padded output lanes (exp(-1e30) == 0).


def _round_up(x: int, m: int) -> int:
    return ((x + m - 1) // m) * m


def _categorical_net_kernel(x_ref, w_ref, b_ref, logits_ref, *, d_out):
    x = x_ref[...]                                  # [TB, Din]   f32
    w = w_ref[...]                                  # [Dpad, Din] bf16 (resident)
    b = b_ref[...]                                  # [1, Dpad]   f32  (resident)

    # MXU matmul: contract the shared Din axis directly (no transposed weight
    # copy).  bf16 inputs, f32 accumulation.
    raw = lax.dot_general(
        x.astype(w.dtype), w,
        dimension_numbers=(((1,), (1,)), ((), ())),
        preferred_element_type=jnp.float32,
    ) + b                                           # [TB, Dpad] f32

    # Numerically-stable log-softmax.  Padded lanes hold ~-1e30 -> exp == 0,
    # so they never pollute the denominator.  Single exp per tile.
    m = jnp.max(raw, axis=-1, keepdims=True)
    shifted = raw - m
    denom = jnp.sum(jnp.exp(shifted), axis=-1, keepdims=True)
    logits = shifted - jnp.log(denom)               # normalized logits

    # Compact store: only the real num_outputs lanes leave the chip.
    logits_ref[...] = logits[:, :d_out]


def prepare_categorical_net_params(weight, bias, *, mxu_dtype=jnp.bfloat16):
    """One-time parameter preparation.  Call OUTSIDE the hot path.

    weight: [num_outputs, num_inputs]  (PyTorch nn.Linear layout)
    bias:   [num_outputs]
    Returns (w_padded [Dpad, Din] mxu_dtype, b_padded [1, Dpad] f32, num_outputs).
    """
    d_out, d_in = weight.shape
    d_pad = max(_LANE, _round_up(d_out, _LANE))
    w_padded = jnp.zeros((d_pad, d_in), mxu_dtype).at[:d_out, :].set(
        weight.astype(mxu_dtype))
    b_padded = jnp.full((1, d_pad), _NEG_PAD, jnp.float32).at[0, :d_out].set(
        bias.astype(jnp.float32))
    return w_padded, b_padded, d_out


def _pick_batch_tile(B: int, *, max_tile: int = 1024, min_steps: int = 2) -> int:
    """Batch tile: multiple of 8 sublanes; >= `min_steps` grid steps when B is
    large enough (v7x megacore), tiles as large as possible up to `max_tile`
    otherwise (amortize per-step overhead on single-core v5e/v6e)."""
    tb_full = _round_up(B, 8)
    if tb_full <= 8 * min_steps:            # too small to split meaningfully
        return tb_full
    steps = max(min_steps, pl.cdiv(B, max_tile))
    return _round_up(pl.cdiv(B, steps), 8)


def categorical_net_forward(x, w_padded, b_padded, d_out, *, max_batch_tile=1024):
    """CategoricalNet forward: returns the normalized logits [B, d_out] f32
    (the Categorical distribution parameter).  probs = jnp.exp(logits) — left
    to the consumer so XLA fuses it and the kernel writes half the bytes.

    Args:
      x:        [B, num_inputs] float32 activations.
      w_padded: [Dpad, num_inputs] (from prepare_categorical_net_params).
      b_padded: [1, Dpad] float32 (from prepare_categorical_net_params).
      d_out:    true num_outputs (static Python int).
    """
    B, d_in = x.shape
    d_pad = w_padded.shape[0]

    tb = _pick_batch_tile(B, max_tile=max_batch_tile)
    grid = (pl.cdiv(B, tb),)                # ragged last block handled by Pallas

    logits = pl.pallas_call(
        functools.partial(_categorical_net_kernel, d_out=d_out),
        out_shape=jax.ShapeDtypeStruct((B, d_out), jnp.float32),
        grid=grid,
        in_specs=[
            pl.BlockSpec((tb, d_in), lambda i: (i, 0)),      # x: tiled over batch
            pl.BlockSpec((d_pad, d_in), lambda i: (0, 0)),   # weight: resident
            pl.BlockSpec((1, d_pad), lambda i: (0, 0)),      # bias: resident
        ],
        out_specs=pl.BlockSpec((tb, d_out), lambda i: (i, 0)),  # compact output
        compiler_params=pltpu.CompilerParams(
            dimension_semantics=("parallel",),               # megacore-shardable on v7x
        ),
    )(x, w_padded, b_padded)

    return logits


def _orthogonal_init(key, shape, gain):
    """Deterministic orthogonal init (same spirit as nn.init.orthogonal_)."""
    rows, cols = shape
    flat = jax.random.normal(key, (max(rows, cols), min(rows, cols)), jnp.float32)
    q, r = jnp.linalg.qr(flat)
    d = jnp.sign(jnp.diagonal(r))
    q = q * d[None, :]
    if rows < cols:
        q = q.T
    return gain * q[:rows, :cols]


# TODO(synk): CustomFixedCategorical.sample/log_probs/entropy/mode are
# distribution-object methods outside the module's forward pass; this kernel
# emits the distribution parameter (normalized logits) only.


if __name__ == "__main__":
    key = jax.random.PRNGKey(0)
    k_x, k_w = jax.random.split(key)

    batch = 8
    num_inputs = 32
    num_outputs = 16

    # Parameters per CategoricalNet.__init__: orthogonal weight (gain=0.01), zero bias.
    weight = _orthogonal_init(k_w, (num_outputs, num_inputs), gain=0.01)
    bias = jnp.zeros((num_outputs,), jnp.float32)
    x = jax.random.normal(k_x, (batch, num_inputs), jnp.float32)

    # One-time parameter prep (pad + bf16 cast) — NOT part of the per-step hot path.
    w_padded, b_padded, d_out = prepare_categorical_net_params(weight, bias)
    jax.block_until_ready((w_padded, b_padded))

    logits = categorical_net_forward(x, w_padded, b_padded, d_out)
    probs = jnp.exp(logits)                 # consumer-side probs (XLA fuses this)
    jax.block_until_ready((logits, probs))

    # Reference in plain JAX (same bf16-input / f32-accumulate matmul the MXU does).
    raw_ref = jnp.dot(
        x.astype(jnp.bfloat16), weight.astype(jnp.bfloat16).T,
        preferred_element_type=jnp.float32,
    ) + bias
    logits_ref = raw_ref - jax.scipy.special.logsumexp(raw_ref, axis=-1, keepdims=True)
    probs_ref = jax.nn.softmax(raw_ref, axis=-1)

    assert logits.shape == (batch, num_outputs)
    assert probs.shape == (batch, num_outputs)
    assert jnp.allclose(logits, logits_ref, atol=1e-5), "logits mismatch"
    assert jnp.allclose(probs, probs_ref, atol=1e-5), "probs mismatch"
    assert jnp.allclose(jnp.sum(probs, axis=-1), 1.0, atol=1e-5), "probs not normalized"

    print("KERNEL_OK")
</pallas_src>

<mosaic_0001>
module attributes {stable_mosaic.version = 11 : i64} {
  func.func @_categorical_net_kernel(%arg0: i32, %arg1: memref<8x32xf32, #tpu.memory_space<vmem>>, %arg2: memref<128x32xbf16, #tpu.memory_space<vmem>>, %arg3: memref<1x128xf32, #tpu.memory_space<vmem>>, %arg4: memref<8x16xf32, #tpu.memory_space<vmem>>) attributes {dimension_semantics = [#tpu.dimension_semantics<parallel>], iteration_bounds = array<i64: 1>, scalar_prefetch = 0 : i64, scratch_operands = 0 : i64, tpu.core_type = #tpu.core_type<tc>, window_params = [{transform_indices = @transform_0, window_bounds = array<i64: 8, 32>}, {pipeline_mode = #tpu.pipeline_mode<synchronous>, transform_indices = @transform_1, window_bounds = array<i64: 128, 32>}, {pipeline_mode = #tpu.pipeline_mode<synchronous>, transform_indices = @transform_2, window_bounds = array<i64: 1, 128>}, {transform_indices = @transform_3, window_bounds = array<i64: 8, 16>}]} {
    %c0 = arith.constant 0 : index
    %c0_0 = arith.constant 0 : index
    %0 = vector.load %arg1[%c0, %c0_0] : memref<8x32xf32, #tpu.memory_space<vmem>>, vector<8x32xf32>
    %c0_1 = arith.constant 0 : index
    %c0_2 = arith.constant 0 : index
    %1 = vector.load %arg2[%c0_1, %c0_2] : memref<128x32xbf16, #tpu.memory_space<vmem>>, vector<128x32xbf16>
    %c0_3 = arith.constant 0 : index
    %c0_4 = arith.constant 0 : index
    %2 = vector.load %arg3[%c0_3, %c0_4] : memref<1x128xf32, #tpu.memory_space<vmem>>, vector<1x128xf32>
    %3 = arith.truncf %0 : vector<8x32xf32> to vector<8x32xbf16>
    %cst = arith.constant dense<0.000000e+00> : vector<8x128xf32>
    %4 = tpu.matmul %3, %1, %cst {dimension_numbers = #tpu.dot_dimension_numbers<[1], [1], [0], [0], [0, 0, 1, 0], [], []>} : vector<8x32xbf16>, vector<128x32xbf16>, vector<8x128xf32> -> vector<8x128xf32>
    %5 = vector.broadcast %2 : vector<1x128xf32> to vector<8x128xf32>
    %6 = arith.addf %4, %5 : vector<8x128xf32>
    %cst_5 = arith.constant dense<0xFF800000> : vector<8xf32>
    %7 = vector.multi_reduction <maximumf>, %6, %cst_5 [1] : vector<8x128xf32> to vector<8xf32>
    %8 = vector.shape_cast %7 : vector<8xf32> to vector<8x1xf32>
    %9 = vector.broadcast %8 : vector<8x1xf32> to vector<8x128xf32>
    %10 = arith.subf %6, %9 : vector<8x128xf32>
    %11 = math.exp %10 : vector<8x128xf32>
    %cst_6 = arith.constant dense<0.000000e+00> : vector<8xf32>
    %12 = vector.multi_reduction <add>, %11, %cst_6 [1] : vector<8x128xf32> to vector<8xf32>
    %13 = vector.shape_cast %12 : vector<8xf32> to vector<8x1xf32>
    %14 = math.log %13 : vector<8x1xf32>
    %15 = vector.broadcast %14 : vector<8x1xf32> to vector<8x128xf32>
    %16 = arith.subf %10, %15 : vector<8x128xf32>
    %17 = vector.extract_strided_slice %16 {offsets = [0, 0], sizes = [8, 16], strides = [1, 1]} : vector<8x128xf32> to vector<8x16xf32>
    %c0_7 = arith.constant 0 : index
    %c0_8 = arith.constant 0 : index
    %18 = vector.load %arg4[%c0_7, %c0_8] : memref<8x16xf32, #tpu.memory_space<vmem>>, vector<8x16xf32>
    tpu.vector_store %arg4[%c0_7, %c0_8], %17 {strides = array<i32>} : memref<8x16xf32, #tpu.memory_space<vmem>>, vector<8x16xf32>,
    return
  }
  func.func @transform_0(%arg0: i32) -> (i32, i32) {
    %c0_i32 = arith.constant 0 : i32
    %c0_i32_0 = arith.constant 0 : i32
    return %arg0, %c0_i32 : i32, i32
  }
  func.func @transform_1(%arg0: i32) -> (i32, i32) {
    %c0_i32 = arith.constant 0 : i32
    %c0_i32_0 = arith.constant 0 : i32
    %c0_i32_1 = arith.constant 0 : i32
    return %c0_i32, %c0_i32_0 : i32, i32
  }
  func.func @transform_2(%arg0: i32) -> (i32, i32) {
    %c0_i32 = arith.constant 0 : i32
    %c0_i32_0 = arith.constant 0 : i32
    %c0_i32_1 = arith.constant 0 : i32
    return %c0_i32, %c0_i32_0 : i32, i32
  }
  func.func @transform_3(%arg0: i32) -> (i32, i32) {
    %c0_i32 = arith.constant 0 : i32
    %c0_i32_0 = arith.constant 0 : i32
    return %arg0, %c0_i32 : i32, i32
  }
}

</mosaic_0001>

<llo_original>
// kernel: tpu_custom_call.1
$region0: #{tpu_custom_call.1}
  #allocation0 [shape = 'u32[]', space=smem, size = 0x4, offset = 0x4, fixed_abs, tag = 'smem constant byte address 0x4 - core index']
  #allocation1 [shape = 'u32[144,128]{1,0:T(1,128)}', space=vmem, size = 0x12000, scoped, tag = 'internal scratch']
  %s0 = inlined_call_operand.vmem [shape: f32[8,32], index: 0, kind: input, shape index: {}]
  %s1 = inlined_call_operand.vmem [shape: bf16[128,32], index: 1, kind: input, shape index: {}]
  %s2 = inlined_call_operand.vmem [shape: f32[1,128], index: 2, kind: input, shape index: {}]
  %s3 = inlined_call_operand.hbm [shape: f32[8,16], index: 3, kind: output, shape index: {}]
  %s4 = sld [smem:[#allocation0]]
  $region22: #{tpu_custom_call.1} parent=0
    _
  %s6 = ssub.s32 1, %s4
  %s7 = scalar_select 0, %s6, %s4
  $region1: #{tpu_custom_call.1} parent=0
    #allocation2 [shape = 'u8[4096]{0}', space=vmem, size = 0x1000, scoped, tag = 'output window, operand 0, single buffered']
    #allocation3 [shape = 's32[1]{0}', space=sflag, size = 0x4, scoped, tag = 'scoped memory for tpu_custom_call.1']
    %8 = vsyncpa [#allocation3], 0
    // Predicated region
    $region2: #{tpu_custom_call.1} parent=1 // pred_check
      _
    $region3: #{tpu_custom_call.1} parent=1 // pred_check_branch
      %10 = sbr.rel (0) target = $region5
    $region4: #{tpu_custom_call.1} parent=1 // pred_region
      _
    $region5: #{tpu_custom_call.1} parent=1 // pred_fallthru
      _
    // Predicated region
    $region6: #{tpu_custom_call.1} parent=1 // pred_check
      _
    $region7: #{tpu_custom_call.1} parent=1 // pred_check_branch
      %12 = sbr.rel (0) target = $region9
    $region8: #{tpu_custom_call.1} parent=1 // pred_region
      _
    $region9: #{tpu_custom_call.1} parent=1 // pred_fallthru
      _
    // Predicated region
    $region10: #{tpu_custom_call.1} parent=1 // pred_check
      _
    $region11: #{tpu_custom_call.1} parent=1 // pred_check_branch
      %14 = sbr.rel (0) target = $region13
    $region12: #{tpu_custom_call.1} parent=1 // pred_region
      _
    $region13: #{tpu_custom_call.1} parent=1 // pred_fallthru
      _
    %v16 = vld [vmem:[%s0] sm:$0xff]
    %v17 = vld [vmem:[%s1] sm:$0xf]
    %v18 = vld [vmem:[%s1 + $0x4] sm:$0xf]
    %v19 = vld [vmem:[%s1 + $0x8] sm:$0xf]
    %v20 = vld [vmem:[%s1 + $0xc] sm:$0xf]
    %v21 = vld [vmem:[%s1 + $0x10] sm:$0xf]
    %v22 = vld [vmem:[%s1 + $0x14] sm:$0xf]
    %v23 = vld [vmem:[%s1 + $0x18] sm:$0xf]
    %v24 = vld [vmem:[%s1 + $0x1c] sm:$0xf]
    %v25 = vld [vmem:[%s1 + $0x20] sm:$0xf]
    %v26 = vld [vmem:[%s1 + $0x24] sm:$0xf]
    %v27 = vld [vmem:[%s1 + $0x28] sm:$0xf]
    %v28 = vld [vmem:[%s1 + $0x2c] sm:$0xf]
    %v29 = vld [vmem:[%s1 + $0x30] sm:$0xf]
    %v30 = vld [vmem:[%s1 + $0x34] sm:$0xf]
    %v31 = vld [vmem:[%s1 + $0x38] sm:$0xf]
    %v32 = vld [vmem:[%s1 + $0x3c] sm:$0xf]
    %v33 = vld [vmem:[%s2] sm:$0x1]
    %v34 = vpack.c.bf16 %v16, %v16
    %v36 = vlaneseq
    %v37 = vshrl.u32 %v36, 7
    %v38 = vsub.s32 0, %v37
    %v39 = vrot.slane %v33, %v38
    %v57 = vunpack.c.l.b16 %v17
    %v58 = vunpack.c.l.b16 %v18
    %v59 = vunpack.c.l.b16 %v19
    %v60 = vunpack.c.l.b16 %v20
    %v61 = vunpack.c.l.b16 %v21
    %v62 = vunpack.c.l.b16 %v22
    %v63 = vunpack.c.l.b16 %v23
    %v64 = vunpack.c.l.b16 %v24
    %v65 = vunpack.c.l.b16 %v25
    %v66 = vunpack.c.l.b16 %v26
    %v67 = vunpack.c.l.b16 %v27
    %v68 = vunpack.c.l.b16 %v28
    %v69 = vunpack.c.l.b16 %v29
    %v70 = vunpack.c.l.b16 %v30
    %v71 = vunpack.c.l.b16 %v31
    %v72 = vunpack.c.l.b16 %v32
    %v73 = vpack.c.b16 %v58, %v57
    %v74 = vpack.c.b16 %v60, %v59
    %v75 = vpack.c.b16 %v62, %v61
    %v76 = vpack.c.b16 %v64, %v63
    %v77 = vpack.c.b16 %v66, %v65
    %v78 = vpack.c.b16 %v68, %v67
    %v79 = vpack.c.b16 %v70, %v69
    %v80 = vpack.c.b16 %v72, %v71
    %vm81 = vcmask 261120
    %v83 = vsel %vm81, %v34, 0
    %v86 = vsel %vm81, %v73, 0
    %v89 = vsel %vm81, %v74, 0
    %v92 = vsel %vm81, %v75, 0
    %v95 = vsel %vm81, %v76, 0
    %v98 = vsel %vm81, %v77, 0
    %v101 = vsel %vm81, %v78, 0
    %v104 = vsel %vm81, %v79, 0
    %v107 = vsel %vm81, %v80, 0
    %109 = vmatprep.subr.bf16.mxu0 0
    %110 = vmatpush1.bf16.xpose.msra.mxu0 %v86
    %111 = vmatprep.subr.bf16.mxu0 0
    %112 = vmatpush1.bf16.xpose.msra.mxu0 %v89
    %113 = vmatprep.subr.bf16.mxu0 0
    %114 = vmatpush1.bf16.xpose.msra.mxu0 %v92
    %115 = vmatprep.subr.bf16.mxu0 0
    %116 = vmatpush1.bf16.xpose.msra.mxu0 %v95
    %117 = vmatprep.subr.bf16.mxu0 0
    %118 = vmatpush1.bf16.xpose.msra.mxu0 %v98
    %119 = vmatprep.subr.bf16.mxu0 0
    %120 = vmatpush1.bf16.xpose.msra.mxu0 %v101
    %121 = vmatprep.subr.bf16.mxu0 0
    %122 = vmatpush1.bf16.xpose.msra.mxu0 %v104
    %123 = vmatprep.subr.bf16.mxu0 0
    %124 = vmatpush1.bf16.xpose.msra.mxu0 %v107
    %125 = vmatprep.subr.bf16.mxu0 0
    %126 = vmatpush1.bf16.xpose.msra.mxu0 0
    %127 = vmatprep.subr.bf16.mxu0 0
    %128 = vmatpush1.bf16.xpose.msra.mxu0 0
    %129 = vmatprep.subr.bf16.mxu0 0
    %130 = vmatpush1.bf16.xpose.msra.mxu0 0
    %131 = vmatprep.subr.bf16.mxu0 0
    %132 = vmatpush1.bf16.xpose.msra.mxu0 0
    %133 = vmatprep.subr.bf16.mxu0 0
    %134 = vmatpush1.bf16.xpose.msra.mxu0 0
    %135 = vmatprep.subr.bf16.mxu0 0
    %136 = vmatpush1.bf16.xpose.msra.mxu0 0
    %137 = vmatprep.subr.bf16.mxu0 0
    %138 = vmatpush1.bf16.xpose.msra.mxu0 0
    %139 = vmatprep.subr.bf16.mxu0 0
    %140 = vmatpush1.bf16.xpose.msra.mxu0 0
    %141 = vmatprep.mubr.bf16.mxu0 0
    %142 = vmatmul.mubr.bf16.gmra.mrb[0].mxu0 %v83
    %v143 = vpop.f32.mrb[0].mxu0
    %v144 = vadd.f32 %v39, %v143
    %v145 = vpop.f32.mrb[0].mxu0
    %v146 = vpop.f32.mrb[0].mxu0
    %v147 = vpop.f32.mrb[0].mxu0
    %148 = vdwg.mxu0
    %149 = vmax.xlane.f32.xlu0 %v144
    %v150 = vpop.xlane.xlu0 %149
    %v151 = vsub.f32 %v144, %v150
    %v152 = vmul.f32 %v151, 1.442695
    %v153 = vpow.pop %v152
    %154 = vadd.xlane.f32.xlu0 %v153
    %v155 = vpop.xlane.xlu0 %154
    %v156 = vlog2.pop %v155
    %v157 = vmul.f32 %v156, 0.6931472
    %v158 = vsub.f32 %v151, %v157
    %vm159 = vcmask 130048
    %160 = vst.msk [vmem:[#allocation2] sm:$0xff] %vm159, %v158
    // Predicated region
    $region14: #{tpu_custom_call.1} parent=1 // pred_check
      _
    $region15: #{tpu_custom_call.1} parent=1 // pred_check_branch
      %162 = sbr.rel (0) target = $region17
    $region16: #{tpu_custom_call.1} parent=1 // pred_region
      %s164 = ssub.s32 128, 128
      %165 = vsyncadd [#allocation3], %s164
      %s167 = sshll.u32 [#allocation2], 4
      %s168 = int_to_ptr.vmem [resolvable:$true] %s167
      %170 = dma.vmem_to_hbm [thread:$0]  %s168, 128, %s3, [#allocation3]
    $region17: #{tpu_custom_call.1} parent=1 // pred_fallthru
      _
    // Predicated region
    $region18: #{tpu_custom_call.1} parent=1 // pred_check
      _
    $region19: #{tpu_custom_call.1} parent=1 // pred_check_branch
      %172 = sbr.rel (0) target = $region21
    $region20: #{tpu_custom_call.1} parent=1 // pred_region
      %173 = dma.done [#allocation3], 128
    $region21: #{tpu_custom_call.1} parent=1 // pred_fallthru
      _
    %174 = vsyncpa [#allocation3], 1

</llo_original>
